<compile_context>
chip_gen: v6e
topology: v6e:2x2x1
jax: 0.10.0
libtpu: 0.0.40
codegen_flags: <defaults>
</compile_context>

<pallas_src>
import functools

import jax
import jax.numpy as jnp
from jax import lax
from jax.experimental import pallas as pl
from jax.experimental.pallas import tpu as pltpu

_LANES = 128
_SUBLANES = 8


def _hloss_kernel(x_ref, o_ref, *, tile_rows, total_rows, steps_per_slice,
                  needs_mask):
    s = pl.program_id(0)   # parallel slice (megacore sharding on v7x)
    i = pl.program_id(1)   # reduction steps within the slice ("arbitrary")

    @pl.when(i == 0)
    def _():
        o_ref[...] = jnp.zeros_like(o_ref)

    x = x_ref[...].astype(jnp.float32)   # bf16/f16 feeds upcast in-kernel
    xlx = x * jnp.log(x)                 # EUP log + VPU mul

    if needs_mask:
        # Logical (unclamped) first row of this tile; rows past the end of the
        # array (partial-block padding / overhang steps of the last slice) are
        # zeroed.  jnp.where does not propagate NaN/garbage from the unselected
        # branch, so boundary-block junk cannot poison the sum.
        row0 = (s * steps_per_slice + i) * tile_rows
        row_ids = row0 + lax.broadcasted_iota(jnp.int32, (tile_rows, 1), 0)
        xlx = jnp.where(row_ids < total_rows, xlx, jnp.float32(0.0))

    # Per-(sublane, lane) partial sums: the (T,128)->(T/8,8,128) reshape is
    # tiling-aligned (free); the axis-0 sum is pure VPU adds across vregs.
    o_ref[...] += xlx.reshape(tile_rows // _SUBLANES, _SUBLANES, _LANES).sum(axis=0)


def hloss(x: jax.Array, *, tile_rows: int = 2048) -> jax.Array:
    """Entropy loss b = -sum(x * log(x)) computed by a Pallas TPU kernel (f32 scalar)."""
    n = x.size
    flat = x.reshape(-1)                              # free reshape, no HBM copy

    # Lane alignment only: pad at most 127 elements with 1.0 (1*log(1) = 0).
    pad = (-n) % _LANES
    if pad:
        flat = jnp.pad(flat, (0, pad), constant_values=1)
    rows = flat.size // _LANES
    x2d = flat.reshape(rows, _LANES)

    # Row-tile: as large as requested but never (much) larger than the array;
    # always a multiple of 8 sublanes.
    tile = min(tile_rows, ((rows + _SUBLANES - 1) // _SUBLANES) * _SUBLANES)
    tile = max(tile, _SUBLANES)
    total_steps = -(-rows // tile)

    # Outer "parallel" axis: up to 2x on v7x (2 TCs/chip), no harm elsewhere.
    num_slices = 2 if total_steps >= 2 else 1
    steps_per_slice = -(-total_steps // num_slices)
    last_block = total_steps - 1

    # Mask is only needed when the last block is partial or when the grid has
    # overhang steps that re-read the final block; otherwise compile it out.
    needs_mask = (rows % tile != 0) or (num_slices * steps_per_slice != total_steps)

    grid = (num_slices, steps_per_slice)

    kernel = functools.partial(
        _hloss_kernel,
        tile_rows=tile,
        total_rows=rows,
        steps_per_slice=steps_per_slice,
        needs_mask=needs_mask,
    )

    out = pl.pallas_call(
        kernel,
        out_shape=jax.ShapeDtypeStruct((num_slices * _SUBLANES, _LANES), jnp.float32),
        grid=grid,
        in_specs=[
            pl.BlockSpec(
                (tile, _LANES),
                # Clamp so overhang steps of the last slice re-read the final
                # block; their contribution is masked to zero in-kernel.
                lambda s, i: (jnp.minimum(s * steps_per_slice + i, last_block), 0),
            )
        ],
        out_specs=pl.BlockSpec((_SUBLANES, _LANES), lambda s, i: (s, 0)),
        compiler_params=pltpu.CompilerParams(
            dimension_semantics=("parallel", "arbitrary"),
        ),
        cost_estimate=pl.CostEstimate(
            flops=3 * n,
            transcendentals=n,
            bytes_accessed=n * x.dtype.itemsize
            + num_slices * _SUBLANES * _LANES * 4,
        ),
    )(x2d)

    # Single final cross-lane/sublane reduction + negation, done once outside
    # the hot loop.
    return -jnp.sum(out)


if __name__ == "__main__":
    key = jax.random.PRNGKey(0)
    # Small NCHW input, strictly positive (log requires x > 0), like softmax probs.
    B, C, H, W = 2, 4, 16, 16
    logits = jax.random.normal(key, (B, C, H, W), dtype=jnp.float32)
    x = jax.nn.softmax(logits, axis=1)

    result = hloss(x)
    jax.block_until_ready(result)

    # Reference check against plain JAX.
    ref = -jnp.sum(x * jnp.log(x))
    assert jnp.allclose(result, ref, rtol=1e-5, atol=1e-5), (result, ref)

    print("KERNEL_OK")
</pallas_src>

<mosaic_0001>
module attributes {stable_mosaic.version = 11 : i64} {
  func.func @_hloss_kernel(%arg0: i32, %arg1: i32, %arg2: memref<16x128xf32, #tpu.memory_space<vmem>>, %arg3: memref<8x128xf32, #tpu.memory_space<vmem>>) attributes {dimension_semantics = [#tpu.dimension_semantics<parallel>, #tpu.dimension_semantics<arbitrary>], iteration_bounds = array<i64: 1, 1>, scalar_prefetch = 0 : i64, scratch_operands = 0 : i64, tpu.core_type = #tpu.core_type<tc>, window_params = [{transform_indices = @transform_0, window_bounds = array<i64: 16, 128>}, {transform_indices = @transform_1, window_bounds = array<i64: 8, 128>}]} {
    %c0_i32 = arith.constant 0 : i32
    %0 = arith.cmpi eq, %arg1, %c0_i32 : i32
    %1 = arith.extui %0 : i1 to i32
    %c0_i32_0 = arith.constant 0 : i32
    %2 = arith.cmpi ne, %1, %c0_i32_0 : i32
    scf.if %2 {
      %cst_6 = arith.constant 0.000000e+00 : f32
      %11 = vector.broadcast %cst_6 : f32 to vector<8x128xf32>
      %c0_7 = arith.constant 0 : index
      %c0_8 = arith.constant 0 : index
      %12 = vector.load %arg3[%c0_7, %c0_8] : memref<8x128xf32, #tpu.memory_space<vmem>>, vector<8x128xf32>
      tpu.vector_store %arg3[%c0_7, %c0_8], %11 {strides = array<i32>} : memref<8x128xf32, #tpu.memory_space<vmem>>, vector<8x128xf32>,
    } else {
    }
    %c0 = arith.constant 0 : index
    %c0_1 = arith.constant 0 : index
    %3 = vector.load %arg2[%c0, %c0_1] : memref<16x128xf32, #tpu.memory_space<vmem>>, vector<16x128xf32>
    %4 = math.log %3 : vector<16x128xf32>
    %5 = arith.mulf %3, %4 : vector<16x128xf32>
    %c0_2 = arith.constant 0 : index
    %c0_3 = arith.constant 0 : index
    %6 = vector.load %arg3[%c0_2, %c0_3] : memref<8x128xf32, #tpu.memory_space<vmem>>, vector<8x128xf32>
    %7 = vector.shape_cast %5 : vector<16x128xf32> to vector<2x8x128xf32>
    %cst = arith.constant dense<0.000000e+00> : vector<8x128xf32>
    %8 = vector.multi_reduction <add>, %7, %cst [0] : vector<2x8x128xf32> to vector<8x128xf32>
    %9 = arith.addf %6, %8 : vector<8x128xf32>
    %c0_4 = arith.constant 0 : index
    %c0_5 = arith.constant 0 : index
    %10 = vector.load %arg3[%c0_4, %c0_5] : memref<8x128xf32, #tpu.memory_space<vmem>>, vector<8x128xf32>
    tpu.vector_store %arg3[%c0_4, %c0_5], %9 {strides = array<i32>} : memref<8x128xf32, #tpu.memory_space<vmem>>, vector<8x128xf32>,
    return
  }
  func.func @transform_0(%arg0: i32, %arg1: i32) -> (i32, i32) {
    %c1_i32 = arith.constant 1 : i32
    %0 = arith.muli %arg0, %c1_i32 : i32
    %1 = arith.addi %0, %arg1 : i32
    %c0_i32 = arith.constant 0 : i32
    %2 = arith.minsi %1, %c0_i32 : i32
    %c0_i32_0 = arith.constant 0 : i32
    %c0_i32_1 = arith.constant 0 : i32
    return %2, %c0_i32_0 : i32, i32
  }
  func.func @transform_1(%arg0: i32, %arg1: i32) -> (i32, i32) {
    %c0_i32 = arith.constant 0 : i32
    %c0_i32_0 = arith.constant 0 : i32
    return %arg0, %c0_i32 : i32, i32
  }
}

</mosaic_0001>

<llo_original>
// kernel: tpu_custom_call.1
$region0: #{tpu_custom_call.1}
  #allocation0 [shape = 'u32[]', space=smem, size = 0x4, offset = 0x4, fixed_abs, tag = 'smem constant byte address 0x4 - core index']
  #allocation1 [shape = 'u32[144,128]{1,0:T(1,128)}', space=vmem, size = 0x12000, scoped, tag = 'internal scratch']
  %s0 = inlined_call_operand.hbm [shape: f32[16,128], index: 0, kind: input, shape index: {}]
  %s1 = inlined_call_operand.hbm [shape: f32[8,128], index: 1, kind: output, shape index: {}]
  %s2 = sld [smem:[#allocation0]]
  $region22: #{tpu_custom_call.1} parent=0
    _
  %s4 = ssub.s32 1, %s2
  %s5 = scalar_select 0, %s4, %s2
  $region1: #{tpu_custom_call.1} parent=0
    #allocation2 [shape = 'u8[8192]{0}', space=vmem, size = 0x2000, scoped, tag = 'input window, operand 0, single buffered']
    #allocation3 [shape = 's32[1]{0}', space=sflag, size = 0x4, scoped, tag = 'scoped memory for tpu_custom_call.1']
    #allocation4 [shape = 's32[1]{0}', space=sflag, size = 0x4, scoped, tag = 'scoped memory for tpu_custom_call.1']
    #allocation5 [shape = 'u8[4096]{0}', space=vmem, size = 0x1000, scoped, tag = 'output window, operand 0, single buffered']
    %6 = vsyncpa [#allocation3], 0
    %7 = vsyncpa [#allocation4], 0
    // Predicated region
    $region2: #{tpu_custom_call.1} parent=1 // pred_check
      _
    $region3: #{tpu_custom_call.1} parent=1 // pred_check_branch
      %9 = sbr.rel (0) target = $region5
    $region4: #{tpu_custom_call.1} parent=1 // pred_region
      %s10 = sadd.s32 0, 0
      %p11 = scmp.lt.s32.totalorder %s10, 0
      %s12 = scalar_select %p11, %s10, 0
      %s13 = smul.u32 2, %s12
      %s15 = ssub.s32 256, 256
      %16 = vsyncadd [#allocation3], %s15
      %s17 = smul.addr %s13, 128
      %s18 = scalar_lea.hbm %s0, %s17
      %s19 = sshll.u32 [#allocation2], 4
      %s20 = int_to_ptr.vmem [resolvable:$true] %s19
      %25 = dma.hbm_to_vmem [thread:$0]  %s18, 256, %s20, [#allocation3], 128, 128, 8
    $region5: #{tpu_custom_call.1} parent=1 // pred_fallthru
      _
    // Predicated region
    $region6: #{tpu_custom_call.1} parent=1 // pred_check
      _
    $region7: #{tpu_custom_call.1} parent=1 // pred_check_branch
      %27 = sbr.rel (0) target = $region9
    $region8: #{tpu_custom_call.1} parent=1 // pred_region
      %28 = dma.done [#allocation3], 256
    $region9: #{tpu_custom_call.1} parent=1 // pred_fallthru
      _
    %s29 = sadd.s32 0, 0
    %p30 = scmp.lt.s32.totalorder %s29, 0
    %s31 = scalar_select %p30, %s29, 0
    %s32 = smul.u32 2, %s31
    %p33 = scmp.eq.s32.totalorder 0, 0
    // Predicated region
    $region10: #{tpu_custom_call.1} parent=1 // pred_check
      %p34 = pneg %p33
    $region11: #{tpu_custom_call.1} parent=1 // pred_check_branch
      %36 = sbr.rel (%p34) target = $region13
    $region12: #{tpu_custom_call.1} parent=1 // pred_region
      %37 = vst [vmem:[#allocation5] sm:$0xff] 0.0
    $region13: #{tpu_custom_call.1} parent=1 // pred_fallthru
      _
    %v38 = vld [vmem:[#allocation2] sm:$0xff]
    %v39 = vld [vmem:[#allocation2 + $0x8] sm:$0xff]
    %v40 = vlog2.pop %v38
    %v41 = vmul.f32 %v40, 0.6931472
    %v42 = vlog2.pop %v39
    %v43 = vmul.f32 %v42, 0.6931472
    %v44 = vmul.f32 %v38, %v41
    %v45 = vmul.f32 %v39, %v43
    %v46 = vld [vmem:[#allocation5] sm:$0xff]
    %v47 = vadd.f32 %v44, %v45
    %v48 = vadd.f32 %v46, %v47
    %49 = vst [vmem:[#allocation5] sm:$0xff] %v48
    // Predicated region
    $region14: #{tpu_custom_call.1} parent=1 // pred_check
      _
    $region15: #{tpu_custom_call.1} parent=1 // pred_check_branch
      %51 = sbr.rel (0) target = $region17
    $region16: #{tpu_custom_call.1} parent=1 // pred_region
      %s53 = ssub.s32 128, 128
      %54 = vsyncadd [#allocation4], %s53
      %s56 = sshll.u32 [#allocation5], 4
      %s57 = int_to_ptr.vmem [resolvable:$true] %s56
      %59 = dma.vmem_to_hbm [thread:$0]  %s57, 128, %s1, [#allocation4]
    $region17: #{tpu_custom_call.1} parent=1 // pred_fallthru
      _
    // Predicated region
    $region18: #{tpu_custom_call.1} parent=1 // pred_check
      _
    $region19: #{tpu_custom_call.1} parent=1 // pred_check_branch
      %61 = sbr.rel (0) target = $region21
    $region20: #{tpu_custom_call.1} parent=1 // pred_region
      %62 = dma.done [#allocation4], 128
    $region21: #{tpu_custom_call.1} parent=1 // pred_fallthru
      _
    %63 = vsyncpa [#allocation3], 1
    %64 = vsyncpa [#allocation4], 1

</llo_original>
